<compile_context>
chip_gen: v5e
topology: v5e:2x2
jax: 0.10.0
libtpu: 0.0.40
codegen_flags: <defaults>
</compile_context>

<pallas_src>
import math

import jax
import jax.numpy as jnp
from jax import lax
from jax.experimental import pallas as pl
from jax.experimental.pallas import tpu as pltpu


def _round_up(a: int, b: int) -> int:
    return (a + b - 1) // b * b


def _linear_kernel(x_ref, w_ref, o_ref):
    # x_ref: (TM, K)          -- one M-tile of the flattened input
    # w_ref: (N_pad, K)       -- PyTorch (out, in) layout, N padded to 128;
    #                            constant index_map -> stays resident in VMEM
    # o_ref: (TM, N_pad)      -- lane-dense output tile
    o_ref[...] = lax.dot_general(
        x_ref[...],
        w_ref[...],
        dimension_numbers=(((1,), (1,)), ((), ())),  # contract K with K
        preferred_element_type=jnp.float32,
    ).astype(o_ref.dtype)


def linear_synapse_conn(
    x,
    weight,
    wmin=-jnp.inf,
    wmax=jnp.inf,
    step_mode="s",
    *,
    tile_m_max=1024,
    prefer_xla_below_rows=0,
):
    """Forward pass of LinearSynapseConn (nn.Linear, bias=False).

    Args:
      x: [..., in_features] input ([B, in] for 's', [T, B, in] for 'm').
      weight: [out_features, in_features], PyTorch nn.Linear convention.
      wmin, wmax: API parity only. forward() does NOT clamp weights in the
        reference module (clamp_weights() is a separate method).
      step_mode: 's' or 'm' — both reduce to the same matmul over the last dim.
      tile_m_max: upper bound on the M tile (multiple of 8).
      prefer_xla_below_rows: if M is below this, skip Pallas and let XLA fuse
        the tiny matmul (0 = always use the Pallas kernel).
    """
    if step_mode not in ("s", "m"):
        raise ValueError(
            f"LinearSynapseConn.step_mode should be 'm' or 's', got {step_mode}"
        )
    out_features, in_features = weight.shape
    assert x.shape[-1] == in_features

    lead_shape = x.shape[:-1]
    m = int(math.prod(lead_shape)) if lead_shape else 1
    x2d = x.reshape(m, in_features)

    # Tiny-dispatch fallback: a handful of MXU passes is dominated by kernel
    # launch / per-step overhead; XLA's fused path wins there.
    if m < prefer_xla_below_rows:
        y2d = lax.dot_general(
            x2d, weight,
            dimension_numbers=(((1,), (1,)), ((), ())),
            preferred_element_type=jnp.float32,
        ).astype(x.dtype)
        return y2d.reshape(*lead_shape, out_features)

    itemsize = jnp.dtype(x.dtype).itemsize

    # Lane-dense output: pad N up to a multiple of 128 (full vregs, unmasked vst).
    n_pad = _round_up(out_features, 128)
    w_pad = weight
    if n_pad != out_features:
        w_pad = jnp.pad(weight, ((0, n_pad - out_features), (0, 0)))

    # M tile sized from a conservative VMEM budget for the double-buffered
    # x/y tiles (weight is small and resident); multiple of 8, capped.
    xy_budget = 16 * 1024 * 1024
    tm_cap = max(8, xy_budget // (2 * (in_features + n_pad) * itemsize))
    tm = max(8, (min(tile_m_max, tm_cap) // 8) * 8)
    m_aligned = _round_up(m, 8)
    if m_aligned <= tm:
        tm = m_aligned
    m_pad = _round_up(m, tm)
    if m_pad != m:
        x2d = jnp.pad(x2d, ((0, m_pad - m), (0, 0)))

    grid_m = m_pad // tm

    # TODO(synk): for large feature dims (in/out >~ 2K) add K/N grid axes with
    # an accumulator (pl.when init/finalize) so the weight tile also fits VMEM.

    cost = pl.CostEstimate(
        flops=2 * m * in_features * out_features,
        transcendentals=0,
        bytes_accessed=itemsize
        * (m * in_features + out_features * in_features + m * out_features),
    )

    y2d = pl.pallas_call(
        _linear_kernel,
        out_shape=jax.ShapeDtypeStruct((m_pad, n_pad), x.dtype),
        grid_spec=pltpu.PrefetchScalarGridSpec(
            num_scalar_prefetch=0,
            grid=(grid_m,),
            in_specs=[
                # x: one (tm, K) tile per grid step, pipelined/double-buffered.
                pl.BlockSpec((tm, in_features), lambda i: (i, 0)),
                # weight: constant index_map -> resident across all M tiles.
                pl.BlockSpec((n_pad, in_features), lambda i: (0, 0)),
            ],
            out_specs=pl.BlockSpec((tm, n_pad), lambda i: (i, 0)),
        ),
        compiler_params=pltpu.CompilerParams(
            dimension_semantics=("parallel",),  # M tiles independent; 2 TCs on v7x
            vmem_limit_bytes=32 * 1024 * 1024,
        ),
        cost_estimate=cost,
    )(x2d, w_pad)

    y2d = y2d[:m, :out_features]
    return y2d.reshape(*lead_shape, out_features)


def init_linear_weight(key, out_features, in_features, dtype=jnp.float32):
    # Deterministic init mimicking nn.Linear's kaiming-uniform default:
    # U(-1/sqrt(in_features), 1/sqrt(in_features)).
    bound = 1.0 / math.sqrt(in_features)
    return jax.random.uniform(
        key, (out_features, in_features), dtype=dtype, minval=-bound, maxval=bound
    )


if __name__ == "__main__":
    key = jax.random.PRNGKey(0)
    k_w, k_s, k_m, k_b = jax.random.split(key, 4)

    in_features, out_features = 32, 64
    weight = init_linear_weight(k_w, out_features, in_features)

    # single-step mode: x is [batch, in_features]
    batch = 16
    x_s = jax.random.normal(k_s, (batch, in_features), dtype=jnp.float32)
    y_s = linear_synapse_conn(x_s, weight, step_mode="s")
    jax.block_until_ready(y_s)
    assert y_s.shape == (batch, out_features)
    assert jnp.allclose(y_s, x_s @ weight.T, atol=1e-5, rtol=1e-5)

    # multi-step mode: x_seq is [T, batch, in_features]
    T = 8
    x_m = jax.random.normal(k_m, (T, batch, in_features), dtype=jnp.float32)
    y_m = linear_synapse_conn(x_m, weight, step_mode="m")
    jax.block_until_ready(y_m)
    assert y_m.shape == (T, batch, out_features)
    assert jnp.allclose(y_m, x_m @ weight.T, atol=1e-5, rtol=1e-5)

    # multi-tile path: M = T*B = 1600 > tile -> grid of 4 tiles + M remainder pad
    x_b = jax.random.normal(k_b, (T, 200, in_features), dtype=jnp.float32)
    y_b = linear_synapse_conn(x_b, weight, step_mode="m", tile_m_max=512)
    jax.block_until_ready(y_b)
    assert y_b.shape == (T, 200, out_features)
    assert jnp.allclose(y_b, x_b @ weight.T, atol=1e-5, rtol=1e-5)

    print("KERNEL_OK")
</pallas_src>

<mosaic_0001>
module attributes {stable_mosaic.version = 11 : i64} {
  func.func @_linear_kernel(%arg0: i32, %arg1: memref<16x32xf32, #tpu.memory_space<vmem>>, %arg2: memref<128x32xf32, #tpu.memory_space<vmem>>, %arg3: memref<16x128xf32, #tpu.memory_space<vmem>>) attributes {dimension_semantics = [#tpu.dimension_semantics<parallel>], iteration_bounds = array<i64: 1>, scalar_prefetch = 0 : i64, scratch_operands = 0 : i64, tpu.core_type = #tpu.core_type<tc>, window_params = [{transform_indices = @transform_0, window_bounds = array<i64: 16, 32>}, {pipeline_mode = #tpu.pipeline_mode<synchronous>, transform_indices = @transform_1, window_bounds = array<i64: 128, 32>}, {transform_indices = @transform_2, window_bounds = array<i64: 16, 128>}]} {
    %c0 = arith.constant 0 : index
    %c0_0 = arith.constant 0 : index
    %0 = vector.load %arg1[%c0, %c0_0] : memref<16x32xf32, #tpu.memory_space<vmem>>, vector<16x32xf32>
    %c0_1 = arith.constant 0 : index
    %c0_2 = arith.constant 0 : index
    %1 = vector.load %arg2[%c0_1, %c0_2] : memref<128x32xf32, #tpu.memory_space<vmem>>, vector<128x32xf32>
    %cst = arith.constant dense<0.000000e+00> : vector<16x128xf32>
    %2 = tpu.matmul %0, %1, %cst {dimension_numbers = #tpu.dot_dimension_numbers<[1], [1], [0], [0], [0, 0, 1, 0], [], []>} : vector<16x32xf32>, vector<128x32xf32>, vector<16x128xf32> -> vector<16x128xf32>
    %c0_3 = arith.constant 0 : index
    %c0_4 = arith.constant 0 : index
    %3 = vector.load %arg3[%c0_3, %c0_4] : memref<16x128xf32, #tpu.memory_space<vmem>>, vector<16x128xf32>
    tpu.vector_store %arg3[%c0_3, %c0_4], %2 {strides = array<i32>} : memref<16x128xf32, #tpu.memory_space<vmem>>, vector<16x128xf32>,
    return
  }
  func.func @transform_0(%arg0: i32) -> (i32, i32) {
    %c0_i32 = arith.constant 0 : i32
    %c0_i32_0 = arith.constant 0 : i32
    return %arg0, %c0_i32 : i32, i32
  }
  func.func @transform_1(%arg0: i32) -> (i32, i32) {
    %c0_i32 = arith.constant 0 : i32
    %c0_i32_0 = arith.constant 0 : i32
    %c0_i32_1 = arith.constant 0 : i32
    return %c0_i32, %c0_i32_0 : i32, i32
  }
  func.func @transform_2(%arg0: i32) -> (i32, i32) {
    %c0_i32 = arith.constant 0 : i32
    %c0_i32_0 = arith.constant 0 : i32
    return %arg0, %c0_i32 : i32, i32
  }
}

</mosaic_0001>

<llo_original>
// kernel: tpu_custom_call.1
$region0: #{tpu_custom_call.1}
  #allocation0 [shape = 'u32[]', space=smem, size = 0x4, offset = 0x4, fixed_abs, tag = 'smem constant byte address 0x4 - core index']
  #allocation1 [shape = 'u32[72,128]{1,0:T(1,128)}', space=vmem, size = 0x9000, scoped, tag = 'internal scratch']
  %s0 = inlined_call_operand.vmem [shape: f32[16,32], index: 0, kind: input, shape index: {}]
  %s1 = inlined_call_operand.vmem [shape: f32[128,32], index: 1, kind: input, shape index: {}]
  %s2 = inlined_call_operand.hbm [shape: f32[16,128], index: 2, kind: output, shape index: {}]
  %s3 = sld [smem:[#allocation0]]
  $region18: #{tpu_custom_call.1} parent=0
    _
  %s5 = ssub.s32 1, %s3
  %s6 = scalar_select 0, %s5, %s3
  $region1: #{tpu_custom_call.1} parent=0
    #allocation2 [shape = 'u8[8192]{0}', space=vmem, size = 0x2000, scoped, tag = 'output window, operand 0, single buffered']
    #allocation3 [shape = 's32[1]{0}', space=sflag, size = 0x4, scoped, tag = 'scoped memory for tpu_custom_call.1']
    %7 = vsyncpa [#allocation3], 0
    // Predicated region
    $region2: #{tpu_custom_call.1} parent=1 // pred_check
      _
    $region3: #{tpu_custom_call.1} parent=1 // pred_check_branch
      %9 = sbr.rel (0) target = $region5
    $region4: #{tpu_custom_call.1} parent=1 // pred_region
      _
    $region5: #{tpu_custom_call.1} parent=1 // pred_fallthru
      _
    // Predicated region
    $region6: #{tpu_custom_call.1} parent=1 // pred_check
      _
    $region7: #{tpu_custom_call.1} parent=1 // pred_check_branch
      %11 = sbr.rel (0) target = $region9
    $region8: #{tpu_custom_call.1} parent=1 // pred_region
      _
    $region9: #{tpu_custom_call.1} parent=1 // pred_fallthru
      _
    %v12 = vld [vmem:[%s0] sm:$0xff]
    %v13 = vld [vmem:[%s0 + $0x8] sm:$0xff]
    %v14 = vld [vmem:[%s1] sm:$0xff]
    %v15 = vld [vmem:[%s1 + $0x8] sm:$0xff]
    %v16 = vld [vmem:[%s1 + $0x10] sm:$0xff]
    %v17 = vld [vmem:[%s1 + $0x18] sm:$0xff]
    %v18 = vld [vmem:[%s1 + $0x20] sm:$0xff]
    %v19 = vld [vmem:[%s1 + $0x28] sm:$0xff]
    %v20 = vld [vmem:[%s1 + $0x30] sm:$0xff]
    %v21 = vld [vmem:[%s1 + $0x38] sm:$0xff]
    %v22 = vld [vmem:[%s1 + $0x40] sm:$0xff]
    %v23 = vld [vmem:[%s1 + $0x48] sm:$0xff]
    %v24 = vld [vmem:[%s1 + $0x50] sm:$0xff]
    %v25 = vld [vmem:[%s1 + $0x58] sm:$0xff]
    %v26 = vld [vmem:[%s1 + $0x60] sm:$0xff]
    %v27 = vld [vmem:[%s1 + $0x68] sm:$0xff]
    %v28 = vld [vmem:[%s1 + $0x70] sm:$0xff]
    %v29 = vld [vmem:[%s1 + $0x78] sm:$0xff]
    %vm30 = vcmask 261120
    %v32 = vsel %vm30, %v12, 0
    %v35 = vsel %vm30, %v13, 0
    %v38 = vsel %vm30, %v14, 0
    %v41 = vsel %vm30, %v15, 0
    %v44 = vsel %vm30, %v16, 0
    %v47 = vsel %vm30, %v17, 0
    %v50 = vsel %vm30, %v18, 0
    %v53 = vsel %vm30, %v19, 0
    %v56 = vsel %vm30, %v20, 0
    %v59 = vsel %vm30, %v21, 0
    %v62 = vsel %vm30, %v22, 0
    %v65 = vsel %vm30, %v23, 0
    %v68 = vsel %vm30, %v24, 0
    %v71 = vsel %vm30, %v25, 0
    %v74 = vsel %vm30, %v26, 0
    %v77 = vsel %vm30, %v27, 0
    %v80 = vsel %vm30, %v28, 0
    %v83 = vsel %vm30, %v29, 0
    %85 = vmatpush.xpose.msra.mxu0 %v83
    %86 = vmatpush.xpose.msra.mxu0 %v80
    %87 = vmatpush.xpose.msra.mxu0 %v77
    %88 = vmatpush.xpose.msra.mxu0 %v74
    %89 = vmatpush.xpose.msra.mxu0 %v71
    %90 = vmatpush.xpose.msra.mxu0 %v68
    %91 = vmatpush.xpose.msra.mxu0 %v65
    %92 = vmatpush.xpose.msra.mxu0 %v62
    %93 = vmatpush.xpose.msra.mxu0 %v59
    %94 = vmatpush.xpose.msra.mxu0 %v56
    %95 = vmatpush.xpose.msra.mxu0 %v53
    %96 = vmatpush.xpose.msra.mxu0 %v50
    %97 = vmatpush.xpose.msra.mxu0 %v47
    %98 = vmatpush.xpose.msra.mxu0 %v44
    %99 = vmatpush.xpose.msra.mxu0 %v41
    %100 = vmatpush.xpose.msra.mxu0 %v38
    %101 = vmatmul.f32.gmra.mxu0 %v32
    %v102 = vpop.f32.mrf.mxu0
    %v103 = vadd.f32 0.0, %v102
    %104 = vmatmul.f32.gmra.mxu0 %v35
    %v105 = vpop.f32.mrf.mxu0
    %v106 = vadd.f32 0.0, %v105
    %107 = vdwg.mxu0
    %108 = vst [vmem:[#allocation2] sm:$0xff] %v103
    %109 = vst [vmem:[#allocation2 + $0x8] sm:$0xff] %v106
    // Predicated region
    $region10: #{tpu_custom_call.1} parent=1 // pred_check
      _
    $region11: #{tpu_custom_call.1} parent=1 // pred_check_branch
      %111 = sbr.rel (0) target = $region13
    $region12: #{tpu_custom_call.1} parent=1 // pred_region
      %113 = vsyncadd [#allocation3], 0
      %s114 = sshll.u32 [#allocation2], 4
      %s115 = int_to_ptr.vmem [resolvable:$true] %s114
      %s116 = sshll.u32 %s2, 4
      %s117 = int_to_ptr.hbm [resolvable:$true] %s116
      %122 = dma.vmem_to_hbm [thread:$0]  %s115, 256, %s117, [#allocation3], 128, 128, 8
    $region13: #{tpu_custom_call.1} parent=1 // pred_fallthru
      _
    // Predicated region
    $region14: #{tpu_custom_call.1} parent=1 // pred_check
      _
    $region15: #{tpu_custom_call.1} parent=1 // pred_check_branch
      %124 = sbr.rel (0) target = $region17
    $region16: #{tpu_custom_call.1} parent=1 // pred_region
      %126 = dma.done [#allocation3], 256
    $region17: #{tpu_custom_call.1} parent=1 // pred_fallthru
      _
    %127 = vsyncpa [#allocation3], 1

</llo_original>
